<compile_context>
chip_gen: v5e
topology: v5e:2x2
jax: 0.10.0
libtpu: 0.0.40
codegen_flags: <defaults>
</compile_context>

<pallas_src>
import functools

import jax
import jax.numpy as jnp
from jax import lax
from jax.experimental import pallas as pl
from jax.experimental.pallas import tpu as pltpu


def _kd_kernel(stu_ref, tea_ref, label_ref, out_ref, *, inv_t):
    inv_T = jnp.float32(inv_t)

    # logits scaled by 1/T (constant multiply -> plain VPU op, no divides)
    s_logits = stu_ref[...].astype(jnp.float32) * inv_T
    t_logits = tea_ref[...].astype(jnp.float32) * inv_T

    # ---- student log-softmax: one full-size exp, row-wise log on (TB, 1) ----
    s_shift = s_logits - jnp.max(s_logits, axis=1, keepdims=True)
    log_s = s_shift - jnp.log(jnp.sum(jnp.exp(s_shift), axis=1, keepdims=True))

    # ---- teacher softmax + log-softmax sharing one full-size exp ----
    t_max = jnp.max(t_logits, axis=1, keepdims=True)
    t_shift = t_logits - t_max
    t_exp = jnp.exp(t_shift)
    t_denom = jnp.sum(t_exp, axis=1, keepdims=True)               # (TB, 1)
    t_prob = t_exp * pl.reciprocal(t_denom, approx=False)         # reuse exp(t_shift)
    log_t = t_shift - jnp.log(t_denom)

    # ---- argmax over classes in logit space (exp is monotone); ties -> first ----
    TB, C = t_logits.shape
    col = lax.broadcasted_iota(jnp.int32, (TB, C), 1)
    t_argmax = jnp.min(jnp.where(t_logits >= t_max, col, C), axis=1, keepdims=True)

    # rows where the teacher's prediction agrees with the label
    mask = (label_ref[...] == t_argmax).astype(jnp.float32)        # (TB, 1)
    count = jnp.sum(mask, axis=(0, 1), keepdims=True)              # (1, 1)

    # torch semantics:
    #   correct_s = log_s*mask ; correct_t = t_prob*mask
    #   correct_t[correct_t==0] = 1 ; kl = correct_t*(log(correct_t)-correct_s)
    # masked-out rows contribute 0; masked-in rows where exp() underflowed
    # t_prob to exactly 0 contribute -log_s, kept bit-identical via a cheap
    # select instead of a second full-size log.
    per_elem = jnp.where(t_prob == 0.0, -log_s, t_prob * (log_t - log_s))
    kl_sum = jnp.sum(per_elem * mask, axis=(0, 1), keepdims=True)  # (1, 1)

    # lane-dense (8, 128) partial slab: sublane 0 -> kl_sum, sublane 1 -> count
    sub = lax.broadcasted_iota(jnp.int32, (8, 128), 0)
    slab = jnp.where(sub == 0, kl_sum, jnp.where(sub == 1, count, jnp.float32(0.0)))
    out_ref[...] = slab[None, :, :]


def _pick_tile_b(B, C, budget_bytes=8 * 1024 * 1024):
    """Largest divisor of B (multiple of 8, or B itself) whose double-buffered
    student+teacher f32 tiles fit `budget_bytes` (keeps v7x's 64 MiB VMEM happy)."""
    max_rows = max(8, budget_bytes // (2 * 2 * C * 4))
    for cand in range(min(B, max_rows), 0, -1):
        if B % cand == 0 and (cand % 8 == 0 or cand == B):
            return cand
    return B


def kd_loss_v2(stu_pred, tea_pred, label, temperature, tile_b=None):
    """Pallas implementation of KDLossv2.forward. Returns a scalar float32 loss."""
    B, C = stu_pred.shape
    if tile_b is None:
        tile_b = _pick_tile_b(B, C)
    assert B % tile_b == 0, "tile_b must divide the batch dimension"
    grid = B // tile_b

    label2d = label.astype(jnp.int32).reshape(B, 1)
    itemsize = jnp.dtype(stu_pred.dtype).itemsize

    partials = pl.pallas_call(
        functools.partial(_kd_kernel, inv_t=1.0 / float(temperature)),
        out_shape=jax.ShapeDtypeStruct((grid, 8, 128), jnp.float32),
        grid_spec=pltpu.PrefetchScalarGridSpec(
            num_scalar_prefetch=0,
            grid=(grid,),
            in_specs=[
                pl.BlockSpec((tile_b, C), lambda i: (i, 0)),
                pl.BlockSpec((tile_b, C), lambda i: (i, 0)),
                pl.BlockSpec((tile_b, 1), lambda i: (i, 0)),
            ],
            out_specs=pl.BlockSpec((1, 8, 128), lambda i: (i, 0, 0)),
        ),
        compiler_params=pltpu.CompilerParams(
            dimension_semantics=("parallel",),   # independent blocks -> megacore on v7x
            vmem_limit_bytes=48 * 1024 * 1024,   # within v7x's 64 MiB physical VMEM
        ),
        cost_estimate=pl.CostEstimate(
            flops=12 * B * C,
            transcendentals=2 * B * C,
            bytes_accessed=2 * B * C * itemsize + B * 4 + grid * 8 * 128 * 4,
        ),
    )(stu_pred, tea_pred, label2d)

    kl_total = jnp.sum(partials[:, 0, 0])
    count_total = jnp.sum(partials[:, 1, 0])
    T = jnp.float32(temperature)
    # NOTE: like the torch reference, count==0 (no teacher/label agreement)
    # yields inf/nan; callers guarantee at least one agreeing row.
    return kl_total * (T * T) / count_total


def _reference(stu, tea, label, T):
    s = jax.nn.log_softmax(stu / T, axis=1)
    t = jax.nn.softmax(tea / T, axis=1)
    t_argmax = jnp.argmax(t, axis=1)
    mask = (label == t_argmax).astype(jnp.float32)
    count = jnp.sum(mask)
    maskb = mask[:, None]
    correct_s = s * maskb
    correct_t = t * maskb
    correct_t = jnp.where(correct_t == 0.0, 1.0, correct_t)
    return jnp.sum(correct_t * (jnp.log(correct_t) - correct_s)) * T * T / count


if __name__ == "__main__":
    key = jax.random.PRNGKey(0)
    B, C = 16, 128      # lane-dense class axis
    T = 4.0

    k1, k2, k3 = jax.random.split(key, 3)
    stu = jax.random.normal(k1, (B, C), dtype=jnp.float32)
    tea = jax.random.normal(k2, (B, C), dtype=jnp.float32)

    # make half of the labels agree with the teacher so count > 0 (as in training)
    tea_argmax = jnp.argmax(tea, axis=1).astype(jnp.int32)
    rand_label = jax.random.randint(k3, (B,), 0, C, dtype=jnp.int32)
    label = jnp.where(jnp.arange(B) % 2 == 0, tea_argmax, rand_label)

    # tile_b=8 -> grid of 2 blocks: exercises the batch grid + partial reduction
    loss = kd_loss_v2(stu, tea, label, T, tile_b=8)
    jax.block_until_ready(loss)

    ref = _reference(stu, tea, label, T)
    assert jnp.allclose(loss, ref, rtol=1e-4, atol=1e-5), (loss, ref)

    print("KERNEL_OK")
</pallas_src>

<mosaic_0001>
module attributes {stable_mosaic.version = 11 : i64} {
  func.func @_kd_kernel(%arg0: i32, %arg1: memref<8x128xf32, #tpu.memory_space<vmem>>, %arg2: memref<8x128xf32, #tpu.memory_space<vmem>>, %arg3: memref<8x1xi32, #tpu.memory_space<vmem>>, %arg4: memref<1x8x128xf32, #tpu.memory_space<vmem>>) attributes {dimension_semantics = [#tpu.dimension_semantics<parallel>], iteration_bounds = array<i64: 2>, scalar_prefetch = 0 : i64, scratch_operands = 0 : i64, tpu.core_type = #tpu.core_type<tc>, window_params = [{transform_indices = @transform_0, window_bounds = array<i64: 8, 128>}, {transform_indices = @transform_1, window_bounds = array<i64: 8, 128>}, {transform_indices = @transform_2, window_bounds = array<i64: 8, 1>}, {transform_indices = @transform_3, window_bounds = array<i64: 1, 8, 128>}]} {
    %c0 = arith.constant 0 : index
    %c0_0 = arith.constant 0 : index
    %0 = vector.load %arg1[%c0, %c0_0] : memref<8x128xf32, #tpu.memory_space<vmem>>, vector<8x128xf32>
    %cst = arith.constant 2.500000e-01 : f32
    %1 = vector.broadcast %cst : f32 to vector<8x128xf32>
    %2 = arith.mulf %0, %1 : vector<8x128xf32>
    %c0_1 = arith.constant 0 : index
    %c0_2 = arith.constant 0 : index
    %3 = vector.load %arg2[%c0_1, %c0_2] : memref<8x128xf32, #tpu.memory_space<vmem>>, vector<8x128xf32>
    %cst_3 = arith.constant 2.500000e-01 : f32
    %4 = vector.broadcast %cst_3 : f32 to vector<8x128xf32>
    %5 = arith.mulf %3, %4 : vector<8x128xf32>
    %cst_4 = arith.constant dense<0xFF800000> : vector<8xf32>
    %6 = vector.multi_reduction <maximumf>, %2, %cst_4 [1] : vector<8x128xf32> to vector<8xf32>
    %7 = vector.shape_cast %6 : vector<8xf32> to vector<8x1xf32>
    %8 = vector.broadcast %7 : vector<8x1xf32> to vector<8x128xf32>
    %9 = arith.subf %2, %8 : vector<8x128xf32>
    %10 = math.exp %9 : vector<8x128xf32>
    %cst_5 = arith.constant dense<0.000000e+00> : vector<8xf32>
    %11 = vector.multi_reduction <add>, %10, %cst_5 [1] : vector<8x128xf32> to vector<8xf32>
    %12 = vector.shape_cast %11 : vector<8xf32> to vector<8x1xf32>
    %13 = math.log %12 : vector<8x1xf32>
    %14 = vector.broadcast %13 : vector<8x1xf32> to vector<8x128xf32>
    %15 = arith.subf %9, %14 : vector<8x128xf32>
    %cst_6 = arith.constant dense<0xFF800000> : vector<8xf32>
    %16 = vector.multi_reduction <maximumf>, %5, %cst_6 [1] : vector<8x128xf32> to vector<8xf32>
    %17 = vector.shape_cast %16 : vector<8xf32> to vector<8x1xf32>
    %18 = vector.broadcast %17 : vector<8x1xf32> to vector<8x128xf32>
    %19 = arith.subf %5, %18 : vector<8x128xf32>
    %20 = math.exp %19 : vector<8x128xf32>
    %cst_7 = arith.constant dense<0.000000e+00> : vector<8xf32>
    %21 = vector.multi_reduction <add>, %20, %cst_7 [1] : vector<8x128xf32> to vector<8xf32>
    %22 = vector.shape_cast %21 : vector<8xf32> to vector<8x1xf32>
    %23 = tpu.reciprocal %22 : vector<8x1xf32> -> vector<8x1xf32>
    %24 = vector.broadcast %23 : vector<8x1xf32> to vector<8x128xf32>
    %25 = arith.mulf %20, %24 : vector<8x128xf32>
    %26 = math.log %22 : vector<8x1xf32>
    %27 = vector.broadcast %26 : vector<8x1xf32> to vector<8x128xf32>
    %28 = arith.subf %19, %27 : vector<8x128xf32>
    %29 = tpu.iota {dimensions = array<i32: 1>} : vector<8x128xi32>
    %30 = vector.broadcast %17 : vector<8x1xf32> to vector<8x128xf32>
    %31 = arith.cmpf oge, %5, %30 : vector<8x128xf32>
    %c128_i32 = arith.constant 128 : i32
    %32 = vector.broadcast %c128_i32 : i32 to vector<8x128xi32>
    %33 = arith.select %31, %29, %32 : vector<8x128xi1>, vector<8x128xi32>
    %cst_8 = arith.constant dense<2147483647> : vector<8xi32>
    %34 = vector.multi_reduction <minsi>, %33, %cst_8 [1] : vector<8x128xi32> to vector<8xi32>
    %35 = vector.shape_cast %34 : vector<8xi32> to vector<8x1xi32>
    %c0_9 = arith.constant 0 : index
    %c0_10 = arith.constant 0 : index
    %36 = vector.load %arg3[%c0_9, %c0_10] : memref<8x1xi32, #tpu.memory_space<vmem>>, vector<8x1xi32>
    %37 = arith.cmpi eq, %36, %35 : vector<8x1xi32>
    %38 = arith.extui %37 : vector<8x1xi1> to vector<8x1xi32>
    %39 = arith.sitofp %38 : vector<8x1xi32> to vector<8x1xf32>
    %40 = vector.shape_cast %39 : vector<8x1xf32> to vector<1x8x1xf32>
    %cst_11 = arith.constant dense<0.000000e+00> : vector<1xf32>
    %41 = vector.multi_reduction <add>, %40, %cst_11 [1, 2] : vector<1x8x1xf32> to vector<1xf32>
    %42 = vector.shape_cast %41 : vector<1xf32> to vector<1x1x1xf32>
    %43 = vector.extract %42[0, 0, 0] : f32 from vector<1x1x1xf32>
    %44 = vector.broadcast %43 : f32 to vector<1x1xf32>
    %cst_12 = arith.constant 0.000000e+00 : f32
    %45 = vector.broadcast %cst_12 : f32 to vector<8x128xf32>
    %46 = arith.cmpf oeq, %25, %45 : vector<8x128xf32>
    %cst_13 = arith.constant 0.000000e+00 : f32
    %47 = vector.broadcast %cst_13 : f32 to vector<8x128xf32>
    %48 = arith.subf %47, %15 : vector<8x128xf32>
    %49 = arith.subf %28, %15 : vector<8x128xf32>
    %50 = arith.mulf %25, %49 : vector<8x128xf32>
    %51 = arith.select %46, %48, %50 : vector<8x128xi1>, vector<8x128xf32>
    %52 = vector.broadcast %39 : vector<8x1xf32> to vector<8x128xf32>
    %53 = arith.mulf %51, %52 : vector<8x128xf32>
    %54 = vector.shape_cast %53 : vector<8x128xf32> to vector<1x8x128xf32>
    %cst_14 = arith.constant dense<0.000000e+00> : vector<1xf32>
    %55 = vector.multi_reduction <add>, %54, %cst_14 [1, 2] : vector<1x8x128xf32> to vector<1xf32>
    %56 = vector.shape_cast %55 : vector<1xf32> to vector<1x1x1xf32>
    %57 = vector.extract %56[0, 0, 0] : f32 from vector<1x1x1xf32>
    %58 = vector.broadcast %57 : f32 to vector<1x1xf32>
    %59 = tpu.iota {dimensions = array<i32: 0>} : vector<8x128xi32>
    %c0_i32 = arith.constant 0 : i32
    %60 = vector.broadcast %c0_i32 : i32 to vector<8x128xi32>
    %61 = arith.cmpi eq, %59, %60 : vector<8x128xi32>
    %c1_i32 = arith.constant 1 : i32
    %62 = vector.broadcast %c1_i32 : i32 to vector<8x128xi32>
    %63 = arith.cmpi eq, %59, %62 : vector<8x128xi32>
    %cst_15 = arith.constant 0.000000e+00 : f32
    %64 = vector.shape_cast %44 : vector<1x1xf32> to vector<1x1xf32>
    %65 = vector.broadcast %64 : vector<1x1xf32> to vector<8x128xf32>
    %66 = vector.broadcast %cst_15 : f32 to vector<8x128xf32>
    %67 = arith.select %63, %65, %66 : vector<8x128xi1>, vector<8x128xf32>
    %68 = vector.shape_cast %58 : vector<1x1xf32> to vector<1x1xf32>
    %69 = vector.broadcast %68 : vector<1x1xf32> to vector<8x128xf32>
    %70 = arith.select %61, %69, %67 : vector<8x128xi1>, vector<8x128xf32>
    %71 = vector.shape_cast %70 : vector<8x128xf32> to vector<1x8x128xf32>
    %c0_16 = arith.constant 0 : index
    %c0_17 = arith.constant 0 : index
    %c0_18 = arith.constant 0 : index
    %72 = vector.load %arg4[%c0_16, %c0_17, %c0_18] : memref<1x8x128xf32, #tpu.memory_space<vmem>>, vector<1x8x128xf32>
    tpu.vector_store %arg4[%c0_16, %c0_17, %c0_18], %71 {strides = array<i32>} : memref<1x8x128xf32, #tpu.memory_space<vmem>>, vector<1x8x128xf32>,
    return
  }
  func.func @transform_0(%arg0: i32) -> (i32, i32) {
    %c0_i32 = arith.constant 0 : i32
    %c0_i32_0 = arith.constant 0 : i32
    return %arg0, %c0_i32 : i32, i32
  }
  func.func @transform_1(%arg0: i32) -> (i32, i32) {
    %c0_i32 = arith.constant 0 : i32
    %c0_i32_0 = arith.constant 0 : i32
    return %arg0, %c0_i32 : i32, i32
  }
  func.func @transform_2(%arg0: i32) -> (i32, i32) {
    %c0_i32 = arith.constant 0 : i32
    %c0_i32_0 = arith.constant 0 : i32
    return %arg0, %c0_i32 : i32, i32
  }
  func.func @transform_3(%arg0: i32) -> (i32, i32, i32) {
    %c0_i32 = arith.constant 0 : i32
    %c0_i32_0 = arith.constant 0 : i32
    %c0_i32_1 = arith.constant 0 : i32
    return %arg0, %c0_i32, %c0_i32_0 : i32, i32, i32
  }
}

</mosaic_0001>

<llo_original>
// kernel: tpu_custom_call.1
$region0: #{tpu_custom_call.1}
  #allocation0 [shape = 'u32[]', space=smem, size = 0x4, offset = 0x4, fixed_abs, tag = 'smem constant byte address 0x4 - core index']
  #allocation1 [shape = 'u32[72,128]{1,0:T(1,128)}', space=vmem, size = 0x9000, scoped, tag = 'internal scratch']
  %s0 = inlined_call_operand.vmem [shape: f32[16,128], index: 0, kind: input, shape index: {}]
  %s1 = inlined_call_operand.hbm [shape: f32[16,128], index: 1, kind: input, shape index: {}]
  %s2 = inlined_call_operand.vmem [shape: s32[16,1], index: 2, kind: input, shape index: {}]
  %s3 = inlined_call_operand.hbm [shape: f32[2,8,128], index: 3, kind: output, shape index: {}]
  %s4 = sld [smem:[#allocation0]]
  $region49: #{tpu_custom_call.1} parent=0
    _
  %s6 = ssub.s32 1, %s4
  %s7 = scalar_select 0, %s6, %s4
  $region1: #{tpu_custom_call.1} parent=0
    #allocation2 [shape = 'u8[8192]{0}', space=vmem, size = 0x2000, scoped, tag = 'input window, operand 1']
    #allocation3 [shape = 's32[2]{0}', space=sflag, size = 0x8, scoped, tag = 'scoped memory for tpu_custom_call.1']
    #allocation4 [shape = 's32[2]{0}', space=sflag, size = 0x8, scoped, tag = 'scoped memory for tpu_custom_call.1']
    #allocation5 [shape = 'u8[8192]{0}', space=vmem, size = 0x2000, scoped, tag = 'output window, operand 0']
    %8 = vsyncpa [#allocation3], 0
    %s9 = scalar_lea.sflag [#allocation3], 1
    %10 = vsyncpa %s9, 0
    %11 = vsyncpa [#allocation4], 0
    %s12 = scalar_lea.sflag [#allocation4], 1
    %13 = vsyncpa %s12, 0
    loop: start=0, step=1, limit=4
    $region2: #{tpu_custom_call.1} parent=1 // loop_pre_header
      _
    $region3: #{tpu_custom_call.1} parent=1 // loop_header
      %s15 = sphi 0, %s19
      %p16 = scmp.ge.s32.totalorder %s15, 4
      %s25 = sphi 0, %s27
      %s28 = sphi 0, %s25
      %s29 = sphi 0, %s28
      %s45 = sphi 0, %s29
      %s51 = sphi 0, %s53
      %s54 = sphi 0, %s51
      %s55 = sphi 0, %s54
      %s71 = sphi 0, %s55
      %s77 = sphi 0, %s79
      %s80 = sphi 0, %s77
      %s81 = sphi 0, %s80
      %s97 = sphi 0, %s81
      %s103 = sphi 0, %s105
      %s106 = sphi 0, %s103
      %s107 = sphi 0, %s106
      %s123 = sphi 0, %s107
    $region4: #{tpu_custom_call.1} parent=1 // loop_header_branch
      %18 = sbr.rel (%p16) target = $region8
    $region5: #{tpu_custom_call.1} parent=1 // loop_body
      %s20 = ssub.s32 %s15, 1
      %s21 = ssub.s32 %s15, 2
      %s22 = sadd.s32 %s15, 1
      %s23 = ssub.s32 %s15, %s22
      %p24 = scmp.eq.s32.totalorder %s23, 0
      %s26 = sadd.s32 %s25, 1
      %s27 = scalar_select %p24, %s25, %s26
      %p30 = pneg %p24
      %p31 = scmp.eq.s32.totalorder %s15, 1
      %p32 = por %p30, %p31
      %p33 = scmp.ne.s32.totalorder %s25, %s28
      %p34 = scmp.eq.s32.totalorder %s15, 0
      %p35 = por %p33, %p34
      %p36 = scmp.ne.s32.totalorder %s25, %s28
      %p37 = scmp.eq.s32.totalorder %s20, 1
      %p38 = por %p36, %p37
      %p39 = scmp.ne.s32.totalorder %s28, %s29
      %p40 = scmp.eq.s32.totalorder %s20, 0
      %p41 = por %p39, %p40
      %p42 = scmp.ne.s32.totalorder %s28, %s29
      %p43 = scmp.eq.s32.totalorder %s21, 1
      %p44 = por %p42, %p43
      %p46 = scmp.ne.s32.totalorder %s29, %s45
      %p47 = scmp.eq.s32.totalorder %s21, 0
      %p48 = por %p46, %p47
      %s49 = ssub.s32 %s15, %s22
      %p50 = scmp.eq.s32.totalorder %s49, 0
      %s52 = sadd.s32 %s51, 1
      %s53 = scalar_select %p50, %s51, %s52
      %p56 = pneg %p50
      %p57 = scmp.eq.s32.totalorder %s15, 1
      %p58 = por %p56, %p57
      %p59 = scmp.ne.s32.totalorder %s51, %s54
      %p60 = scmp.eq.s32.totalorder %s15, 0
      %p61 = por %p59, %p60
      %p62 = scmp.ne.s32.totalorder %s51, %s54
      %p63 = scmp.eq.s32.totalorder %s20, 1
      %p64 = por %p62, %p63
      %p65 = scmp.ne.s32.totalorder %s54, %s55
      %p66 = scmp.eq.s32.totalorder %s20, 0
      %p67 = por %p65, %p66
      %p68 = scmp.ne.s32.totalorder %s54, %s55
      %p69 = scmp.eq.s32.totalorder %s21, 1
      %p70 = por %p68, %p69
      %p72 = scmp.ne.s32.totalorder %s55, %s71
      %p73 = scmp.eq.s32.totalorder %s21, 0
      %p74 = por %p72, %p73
      %s75 = ssub.s32 %s15, %s22
      %p76 = scmp.eq.s32.totalorder %s75, 0
      %s78 = sadd.s32 %s77, 1
      %s79 = scalar_select %p76, %s77, %s78
      %p82 = pneg %p76
      %p83 = scmp.eq.s32.totalorder %s15, 1
      %p84 = por %p82, %p83
      %p85 = scmp.ne.s32.totalorder %s77, %s80
      %p86 = scmp.eq.s32.totalorder %s15, 0
      %p87 = por %p85, %p86
      %p88 = scmp.ne.s32.totalorder %s77, %s80
      %p89 = scmp.eq.s32.totalorder %s20, 1
      %p90 = por %p88, %p89
      %p91 = scmp.ne.s32.totalorder %s80, %s81
      %p92 = scmp.eq.s32.totalorder %s20, 0
      %p93 = por %p91, %p92
      %p94 = scmp.ne.s32.totalorder %s80, %s81
      %p95 = scmp.eq.s32.totalorder %s21, 1
      %p96 = por %p94, %p95
      %p98 = scmp.ne.s32.totalorder %s81, %s97
      %p99 = scmp.eq.s32.totalorder %s21, 0
      %p100 = por %p98, %p99
      %s101 = ssub.s32 %s15, %s22
      %p102 = scmp.eq.s32.totalorder %s101, 0
      %s104 = sadd.s32 %s103, 1
      %s105 = scalar_select %p102, %s103, %s104
      %p108 = pneg %p102
      %p109 = scmp.eq.s32.totalorder %s15, 1
      %p110 = por %p108, %p109
      %p111 = scmp.ne.s32.totalorder %s103, %s106
      %p112 = scmp.eq.s32.totalorder %s15, 0
      %p113 = por %p111, %p112
      %p114 = scmp.ne.s32.totalorder %s103, %s106
      %p115 = scmp.eq.s32.totalorder %s20, 1
      %p116 = por %p114, %p115
      %p117 = scmp.ne.s32.totalorder %s106, %s107
      %p118 = scmp.eq.s32.totalorder %s20, 0
      %p119 = por %p117, %p118
      %p120 = scmp.ne.s32.totalorder %s106, %s107
      %p121 = scmp.eq.s32.totalorder %s21, 1
      %p122 = por %p120, %p121
      %p124 = scmp.ne.s32.totalorder %s107, %s123
      %p125 = scmp.eq.s32.totalorder %s21, 0
      %p126 = por %p124, %p125
      %p127 = scmp.le.s32.totalorder 1, %s15
      %p128 = scmp.lt.s32.totalorder %s15, 3
      %p129 = pnand %p127, %p128
      %p130 = pneg %p129
      // Predicated region
      $region9: #{tpu_custom_call.1} parent=5 // pred_check
        _
      $region10: #{tpu_custom_call.1} parent=5 // pred_check_branch
        %132 = sbr.rel (%p129) target = $region12
      $region11: #{tpu_custom_call.1} parent=5 // pred_region
        %s133 = ssub.s32 %s15, 1
      $region12: #{tpu_custom_call.1} parent=5 // pred_fallthru
        _
      %p134 = scmp.lt.s32.totalorder %s15, 2
      // Predicated region
      $region13: #{tpu_custom_call.1} parent=5 // pred_check
        %p135 = pneg %p134
      $region14: #{tpu_custom_call.1} parent=5 // pred_check_branch
        %137 = sbr.rel (%p135) target = $region16
      $region15: #{tpu_custom_call.1} parent=5 // pred_region
        // Predicated region
        $region17: #{tpu_custom_call.1} parent=15 // pred_check
          %p138 = pneg %p35
        $region18: #{tpu_custom_call.1} parent=15 // pred_check_branch
          %140 = sbr.rel (%p138) target = $region20
        $region19: #{tpu_custom_call.1} parent=15 // pred_region
          %p141 = scmp.lt.s32.totalorder %s15, 1
          %s142 = scalar_select %p141, %s15, 1
          %s143 = smul.addr %s142, 8
          %s144 = scalar_lea.vmem %s0, %s143
        $region20: #{tpu_custom_call.1} parent=15 // pred_fallthru
          _
        // Predicated region
        $region21: #{tpu_custom_call.1} parent=15 // pred_check
          %p145 = pneg %p61
        $region22: #{tpu_custom_call.1} parent=15 // pred_check_branch
          %147 = sbr.rel (%p145) target = $region24
        $region23: #{tpu_custom_call.1} parent=15 // pred_region
          %s148 = sand.u32 %s51, 1
          %s149 = scalar_lea.sflag [#allocation3], %s148
          %s150 = sand.u32 %s51, 1
          %s151 = smul.addr %s150, 8
          %s152 = scalar_lea.vmem [#allocation2], %s151
          %154 = vsyncadd %s149, 0
          %s155 = smul.addr %s15, 8
          %s156 = scalar_lea.hbm %s1, %s155
          %s158 = sshll.u32 %s156, 4
          %s159 = int_to_ptr.hbm [resolvable:$true] %s158
          %s160 = sshll.u32 %s152, 4
          %s161 = int_to_ptr.vmem [resolvable:$true] %s160
          %163 = dma.hbm_to_vmem [thread:$0]  %s159, 128, %s161, %s149
        $region24: #{tpu_custom_call.1} parent=15 // pred_fallthru
          _
        // Predicated region
        $region25: #{tpu_custom_call.1} parent=15 // pred_check
          %p164 = pneg %p87
        $region26: #{tpu_custom_call.1} parent=15 // pred_check_branch
          %166 = sbr.rel (%p164) target = $region28
        $region27: #{tpu_custom_call.1} parent=15 // pred_region
          %p167 = scmp.lt.s32.totalorder %s15, 1
          %s168 = scalar_select %p167, %s15, 1
          %s169 = smul.addr %s168, 8
          %s170 = scalar_lea.vmem %s2, %s169
        $region28: #{tpu_custom_call.1} parent=15 // pred_fallthru
          _
      $region16: #{tpu_custom_call.1} parent=5 // pred_fallthru
        _
      %p171 = scmp.le.s32.totalorder 1, %s15
      %p172 = scmp.lt.s32.totalorder %s15, 3
      %p173 = pnand %p171, %p172
      %p174 = pneg %p173
      // Predicated region
      $region29: #{tpu_custom_call.1} parent=5 // pred_check
        _
      $region30: #{tpu_custom_call.1} parent=5 // pred_check_branch
        %176 = sbr.rel (%p173) target = $region32
      $region31: #{tpu_custom_call.1} parent=5 // pred_region
        %s177 = ssub.s32 %s15, 1
        %s178 = sand.u32 %s54, 1
        %s179 = scalar_lea.sflag [#allocation3], %s178
        %s180 = sand.u32 %s54, 1
        %s181 = smul.addr %s180, 8
        %s182 = scalar_lea.vmem [#allocation2], %s181
        // Predicated region
        $region33: #{tpu_custom_call.1} parent=31 // pred_check
          %p183 = pneg %p67
        $region34: #{tpu_custom_call.1} parent=31 // pred_check_branch
          %185 = sbr.rel (%p183) target = $region36
        $region35: #{tpu_custom_call.1} parent=31 // pred_region
          %187 = dma.done %s179, 128
        $region36: #{tpu_custom_call.1} parent=31 // pred_fallthru
          _
        %p188 = scmp.lt.s32.totalorder %s20, 1
        %s189 = scalar_select %p188, %s20, 1
        %s190 = smul.addr %s189, 8
        %s191 = scalar_lea.vmem %s0, %s190
        %p192 = pneg %p41
        %p193 = pneg %p38
        %s194 = sand.u32 %s54, 1
        %s195 = scalar_lea.sflag [#allocation3], %s194
        %s196 = sand.u32 %s54, 1
        %s197 = smul.addr %s196, 8
        %s198 = scalar_lea.vmem [#allocation2], %s197
        %p199 = pneg %p67
        %p200 = pneg %p64
        %p201 = scmp.lt.s32.totalorder %s20, 1
        %s202 = scalar_select %p201, %s20, 1
        %s203 = smul.addr %s202, 8
        %s204 = scalar_lea.vmem %s2, %s203
        %p205 = pneg %p93
        %p206 = pneg %p90
        %p207 = pneg %p119
        %p208 = pneg %p116
        %s209 = sand.u32 %s106, 1
        %s210 = scalar_lea.sflag [#allocation4], %s209
        %s211 = sand.u32 %s106, 1
        %s212 = smul.addr %s211, 8
        %s213 = scalar_lea.vmem [#allocation5], %s212
        %p214 = scmp.lt.s32.totalorder %s20, 1
        %s215 = scalar_select %p214, %s20, 1
        %s216 = smul.addr %s215, 8
        %s217 = scalar_lea.vmem %s0, %s216
        %p218 = scmp.lt.s32.totalorder %s20, 1
        %s219 = scalar_select %p218, %s20, 1
        %s220 = smul.addr %s219, 8
        %s221 = scalar_lea.vmem %s2, %s220
        %v222 = vld [vmem:[%s217] sm:$0xff]
        %v223 = vmul.f32 %v222, 0.25
        %v224 = vld [vmem:[%s182] sm:$0xff]
        %v225 = vmul.f32 %v224, 0.25
        %226 = vmax.xlane.f32.xlu0 %v223
        %v227 = vpop.xlane.xlu0 %226
        %v228 = vsub.f32 %v223, %v227
        %v229 = vmul.f32 %v228, 1.442695
        %v230 = vpow.pop %v229
        %231 = vadd.xlane.f32.xlu0 %v230
        %v232 = vpop.xlane.xlu0 %231
        %v233 = vlog2.pop %v232
        %v234 = vmul.f32 %v233, 0.6931472
        %v235 = vsub.f32 %v228, %v234
        %236 = vmax.xlane.f32.xlu0 %v225
        %v237 = vpop.xlane.xlu0 %236
        %v238 = vsub.f32 %v225, %v237
        %v239 = vmul.f32 %v238, 1.442695
        %v240 = vpow.pop %v239
        %241 = vadd.xlane.f32.xlu0 %v240
        %v242 = vpop.xlane.xlu0 %241
        %v243 = vrcp.pop %v242
        %v244 = vmul.f32 %v242, %v243
        %v245 = vsub.f32 1.0, %v244
        %v246 = vmul.f32 %v243, %v245
        %v247 = vadd.f32 %v243, %v246
        %vm248 = vweird.f32 %v242
        %vm249 = vweird.f32 %v243
        %vm250 = vmor %vm248, %vm249
        %v251 = vsel %vm250, %v243, %v247
        %v252 = vand.u32 2147483647, %v242
        %vm253 = vcmp.eq.f32.partialorder %v252, 8.507059e+37
        %v254 = vand.u32 %v242, 2147483648
        %v255 = vor.u32 1.1754944e-38, %v254
        %v256 = vsel %vm253, %v255, %v251
        %v257 = vmul.f32 %v240, %v256
        %v258 = vlog2.pop %v242
        %v259 = vmul.f32 %v258, 0.6931472
        %v260 = vsub.f32 %v238, %v259
        %v261 = vlaneseq
        %v262 = vand.u32 %v261, 127
        %vm263 = vcmp.ge.f32.partialorder %v225, %v237
        %v264 = vsel %vm263, %v262, 128
        %v265 = vand.u32 %v264, 65535
        %v266 = vshra.s32 %v264, 16
        %v267 = vcvt.s32.f32 %v265
        %v268 = vcvt.s32.f32 %v266
        %269 = vmin.xlane.f32.xlu0 %v268
        %v270 = vpop.xlane.xlu0 %269
        %vm271 = vcmp.eq.f32.partialorder %v268, %v270
        %v272 = vsel %vm271, %v267, inf
        %273 = vmin.xlane.f32.xlu0 %v272
        %v274 = vpop.xlane.xlu0 %273
        %v275 = vcvt.f32.s32 %v274
        %v276 = vcvt.f32.s32 %v270
        %v277 = vshll.u32 %v276, 16
        %v278 = vadd.s32 %v277, %v275
        %v279 = vld [vmem:[%s221] sm:$0xff]
        %vm280 = vcmp.eq.s32.totalorder %v279, %v278
        %v281 = vsel %vm280, 1, 0
        %v282 = vcvt.s32.f32 %v281
        %vm283 = vcmask 7168
        %v284 = vsel %vm283, %v282, 0.0
        %285 = vadd.xlane.f32.xlu0 %v284
        %v286 = vpop.xlane.xlu0 %285
        %v287 = vrot.slane %v286, 4
        %v288 = vadd.f32 %v286, %v287
        %v289 = vrot.slane %v288, 2
        %v290 = vadd.f32 %v288, %v289
        %v291 = vrot.slane %v290, 1
        %v292 = vadd.f32 %v290, %v291
        %s293 = vtos %v292
        %vm294 = vcmp.eq.f32.partialorder %v257, 0.0
        %v295 = vsub.f32 0.0, %v235
        %v296 = vsub.f32 %v260, %v235
        %v297 = vmul.f32 %v257, %v296
        %v298 = vsel %vm294, %v295, %v297
        %300 = vset.pattern.permute.xlu0 0
        %301 = vperm.xlu0 %300, %v282
        %v302 = vpop.permute.xlu0 %301
        %v304 = vmul.f32 %v298, %v302
        %305 = vadd.xlane.f32.xlu0 %v304
        %v306 = vpop.xlane.xlu0 %305
        %v307 = vrot.slane %v306, 4
        %v308 = vadd.f32 %v306, %v307
        %v309 = vrot.slane %v308, 2
        %v310 = vadd.f32 %v308, %v309
        %v311 = vrot.slane %v310, 1
        %v312 = vadd.f32 %v310, %v311
        %s313 = vtos %v312
        %v314 = vlaneseq
        %v315 = vshrl.u32 %v314, 7
        %vm316 = vcmp.eq.s32.totalorder %v315, 0
        %vm317 = vcmp.eq.s32.totalorder %v315, 1
        %v318 = vstv %s293
        %v319 = vsel %vm317, %v318, 0.0
        %v320 = vstv %s313
        %v321 = vsel %vm316, %v320, %v319
        %322 = vst [vmem:[%s213] sm:$0xff] %v321
        %s323 = sand.u32 %s106, 1
        %s324 = scalar_lea.sflag [#allocation4], %s323
        %s325 = sand.u32 %s106, 1
        %s326 = smul.addr %s325, 8
        %s327 = scalar_lea.vmem [#allocation5], %s326
        // Predicated region
        $region37: #{tpu_custom_call.1} parent=31 // pred_check
          %p328 = pneg %p116
        $region38: #{tpu_custom_call.1} parent=31 // pred_check_branch
          %330 = sbr.rel (%p328) target = $region40
        $region39: #{tpu_custom_call.1} parent=31 // pred_region
          %332 = vsyncadd %s324, 0
          %s333 = smul.addr %s20, 8
          %s334 = scalar_lea.hbm %s3, %s333
          %s336 = sshll.u32 %s327, 4
          %s337 = int_to_ptr.vmem [resolvable:$true] %s336
          %s338 = sshll.u32 %s334, 4
          %s339 = int_to_ptr.hbm [resolvable:$true] %s338
          %341 = dma.vmem_to_hbm [thread:$0]  %s337, 128, %s339, %s324
        $region40: #{tpu_custom_call.1} parent=31 // pred_fallthru
          _
      $region32: #{tpu_custom_call.1} parent=5 // pred_fallthru
        _
      %p342 = scmp.le.s32.totalorder 2, %s15
      // Predicated region
      $region41: #{tpu_custom_call.1} parent=5 // pred_check
        %p343 = pneg %p342
      $region42: #{tpu_custom_call.1} parent=5 // pred_check_branch
        %345 = sbr.rel (%p343) target = $region44
      $region43: #{tpu_custom_call.1} parent=5 // pred_region
        %s346 = ssub.s32 %s15, 2
        // Predicated region
        $region45: #{tpu_custom_call.1} parent=43 // pred_check
          %p347 = pneg %p122
        $region46: #{tpu_custom_call.1} parent=43 // pred_check_branch
          %349 = sbr.rel (%p347) target = $region48
        $region47: #{tpu_custom_call.1} parent=43 // pred_region
          %s350 = sand.u32 %s107, 1
          %s351 = scalar_lea.sflag [#allocation4], %s350
          %s352 = sand.u32 %s107, 1
          %s353 = smul.addr %s352, 8
          %s354 = scalar_lea.vmem [#allocation5], %s353
          %356 = dma.done %s351, 128
        $region48: #{tpu_custom_call.1} parent=43 // pred_fallthru
          _
      $region44: #{tpu_custom_call.1} parent=5 // pred_fallthru
        _
    $region6: #{tpu_custom_call.1} parent=1 // loop_footer
      %s19 = sadd.s32 1, %s15
    $region7: #{tpu_custom_call.1} parent=1 // loop_footer_branch
      %14 = sbr.rel target = $region3
    $region8: #{tpu_custom_call.1} parent=1 // loop_exit
      _
    %357 = vsyncpa [#allocation3], 1
    %s358 = scalar_lea.sflag [#allocation3], 1
    %359 = vsyncpa %s358, 1
    %360 = vsyncpa [#allocation4], 1
    %s361 = scalar_lea.sflag [#allocation4], 1
    %362 = vsyncpa %s361, 1

</llo_original>
